<compile_context>
chip_gen: v7x
topology: tpu7x:2x2x1
jax: 0.10.0
libtpu: 0.0.40
codegen_flags: <defaults>
</compile_context>

<pallas_src>
import jax
import jax.numpy as jnp
from jax.experimental import pallas as pl
from jax.experimental.pallas import tpu as pltpu

PACK = 4  # rows folded per physical row: 4*32 = 128 lanes in, 4*64 = 256 lanes out


def _leaf_featurize_kernel(x_ref, w_ref, b_ref, o_ref):
    # x_ref: (tile_m, PACK*K), w_ref: (PACK*K, PACK*N) block-diagonal,
    # b_ref: (1, PACK*N) f32, o_ref: (tile_m, PACK*N)
    acc = jnp.dot(x_ref[...], w_ref[...], preferred_element_type=jnp.float32)
    acc = acc + b_ref[...].astype(jnp.float32)        # bias add in f32
    o_ref[...] = jnp.tanh(acc).astype(o_ref.dtype)    # tanh in f32 (EUP); cast only at store


def prepare_leaf_featurize_params(weight, bias, *, pack=PACK, compute_dtype=jnp.bfloat16):
    """One-time parameter preparation (hoisted out of the forward path).

    weight: [N, K] (PyTorch nn.Linear layout), bias: [N]
    Default compute_dtype is bfloat16 (recommended: bf16 I/O, f32 math in-kernel).
    Returns:
      w_packed: [pack*K, pack*N] block-diagonal copy of weight.T in compute_dtype
      b_packed: [1, pack*N] float32 tiled bias (bias add stays f32 in-kernel)
    """
    n, k = weight.shape
    w_t = weight.T.astype(compute_dtype)  # (K, N)
    w_packed = jnp.zeros((pack * k, pack * n), dtype=w_t.dtype)
    for i in range(pack):
        w_packed = w_packed.at[i * k:(i + 1) * k, i * n:(i + 1) * n].set(w_t)
    b_packed = jnp.tile(bias.astype(jnp.float32).reshape(1, n), (1, pack))
    return w_packed, b_packed


def _is_v7x():
    try:
        kind = jax.devices()[0].device_kind.lower()
        return ("v7" in kind) or ("7x" in kind)
    except Exception:
        return False


def leaf_featurize_unit(x, w_packed, b_packed, *, pack=PACK, tile_m=None, out_dtype=None):
    """Pallas equivalent of LeafFeaturizeUnit.forward.

    x:        [..., atomicUnitSize]   (bf16 recommended; f32 supported)
    w_packed: [pack*atomicUnitSize, pack*nodeFeatureSize] from prepare_leaf_featurize_params
    b_packed: [1, pack*nodeFeatureSize] float32
    returns   [..., nodeFeatureSize]  (dtype = x.dtype unless out_dtype is given)
    """
    orig_shape = x.shape
    k = orig_shape[-1]
    kp, np_ = w_packed.shape
    assert kp == pack * k, "packed weight does not match input feature size"
    n = np_ // pack
    if out_dtype is None:
        out_dtype = x.dtype

    x2 = x.reshape(-1, k)
    m = x2.shape[0]

    m_pad = (-m) % pack
    if m_pad:
        # Slow fallback: jnp.pad here and out2[:m] below each materialize an
        # extra HBM read+write outside the pallas_call.  Keep total row count
        # a multiple of PACK (=4) at the callsite to stay on the zero-copy path.
        x2 = jnp.pad(x2, ((0, m_pad), (0, 0)))
    mp = (m + m_pad) // pack
    xp = x2.reshape(mp, kp)  # contiguous fold -> bitcast, no HBM copy

    x_item = jnp.dtype(x.dtype).itemsize
    o_item = jnp.dtype(out_dtype).itemsize
    w_item = jnp.dtype(w_packed.dtype).itemsize
    per_row_bytes = kp * x_item + np_ * o_item  # one packed row of x-in + y-out

    if tile_m is None:
        # Mem-bound op: large tiles amortize the ~0.35 us fixed per-step overhead.
        desired = 8192 if (x_item + o_item) <= 4 else 4096   # bf16 I/O vs f32 I/O
        budget = 24 << 20                                     # double-buffered x+out tiles
        desired = min(desired, max(8, budget // (2 * per_row_bytes)))
        if _is_v7x() and mp >= 16:
            # >= 2 grid steps so the "parallel" axis shards over both TensorCores.
            desired = min(desired, ((pl.cdiv(mp, 2) + 7) // 8) * 8)
        tile_m = desired
    tile_m = int(tile_m)
    if tile_m >= mp:
        tile_m = mp                              # full dim: always a legal block
    else:
        tile_m = max(8, (tile_m // 8) * 8)       # (8,128) sublane alignment
    grid = (pl.cdiv(mp, tile_m),)

    # Advisory cost estimate with the *logical* FLOP count (not the 4x-inflated
    # block-diagonal count) so XLA keeps treating this op as memory-bound.
    cost = pl.CostEstimate(
        flops=2 * m * k * n,
        transcendentals=m * n,
        bytes_accessed=int(m * k * x_item + m * n * o_item
                           + kp * np_ * w_item + np_ * 4),
    )

    # Explicit scoped-VMEM limit: covers double-buffered x/out tiles + resident
    # params + headroom.  Matters on v5e whose default scoped limit is 16 MiB.
    needed = (2 * tile_m * per_row_bytes
              + 2 * (kp * np_ * w_item + np_ * 4)
              + (8 << 20))
    vmem_limit = int(min(48 << 20, max(32 << 20, needed)))

    out = pl.pallas_call(
        _leaf_featurize_kernel,
        out_shape=jax.ShapeDtypeStruct((mp, np_), out_dtype),
        grid_spec=pltpu.PrefetchScalarGridSpec(
            num_scalar_prefetch=0,
            grid=grid,
            in_specs=[
                pl.BlockSpec((tile_m, kp), lambda i: (i, 0)),
                pl.BlockSpec((kp, np_), lambda i: (0, 0)),   # resident weight (constant index_map)
                pl.BlockSpec((1, np_), lambda i: (0, 0)),    # resident bias   (constant index_map)
            ],
            out_specs=pl.BlockSpec((tile_m, np_), lambda i: (i, 0)),
        ),
        compiler_params=pltpu.CompilerParams(
            dimension_semantics=("parallel",),
            vmem_limit_bytes=vmem_limit),
        cost_estimate=cost,
    )(xp, w_packed, b_packed)

    out2 = out.reshape(mp * pack, n)  # un-fold (bitcast, free)
    if m_pad:
        out2 = out2[:m]               # only on the slow fallback path
    return out2.reshape(*orig_shape[:-1], n)


def _reference(x, weight, bias):
    return jnp.tanh(jnp.einsum("...k,nk->...n", x.astype(jnp.float32),
                               weight.astype(jnp.float32)) + bias.astype(jnp.float32))


if __name__ == "__main__":
    # config.atomicUnitSize = 32, config.nodeFeatureSize = 64
    atomic_unit_size, node_feature_size = 32, 64
    batch, seq = 2, 8

    key = jax.random.PRNGKey(0)
    kx, kw, kb, kx2, kx3 = jax.random.split(key, 5)

    x = jax.random.normal(kx, (batch, seq, atomic_unit_size), dtype=jnp.float32)
    # deterministic "initFunc(..., std=0.03)" analogue
    weight = 0.03 * jax.random.normal(
        kw, (node_feature_size, atomic_unit_size), dtype=jnp.float32)
    bias = 0.03 * jax.random.normal(kb, (node_feature_size,), dtype=jnp.float32)

    y_ref = _reference(x, weight, bias)

    # --- DEFAULT path: bf16 I/O (weights, activations, output); f32 math in-kernel ---
    w_bf16, b_pk = prepare_leaf_featurize_params(weight, bias)        # bf16 by default
    x_bf16 = x.astype(jnp.bfloat16)
    y_bf16 = jax.block_until_ready(leaf_featurize_unit(x_bf16, w_bf16, b_pk))
    assert y_bf16.shape == (batch, seq, node_feature_size)
    assert y_bf16.dtype == jnp.bfloat16
    assert jnp.allclose(y_bf16.astype(jnp.float32), y_ref, atol=2e-2, rtol=2e-2)

    # --- opt-in f32 I/O path: exact match with PyTorch module semantics ---
    w_f32, b_f32 = prepare_leaf_featurize_params(weight, bias, compute_dtype=jnp.float32)
    y_f32 = jax.block_until_ready(leaf_featurize_unit(x, w_f32, b_f32))
    assert jnp.allclose(y_f32, y_ref, atol=1e-5, rtol=1e-5)

    # --- multi-step pipelined grid + ragged last block (M = 16*65 = 1040) ---
    x_big = jax.random.normal(kx2, (16, 65, atomic_unit_size), dtype=jnp.float32)
    y_big = jax.block_until_ready(leaf_featurize_unit(x_big, w_f32, b_f32, tile_m=64))
    assert jnp.allclose(y_big, _reference(x_big, weight, bias), atol=1e-5, rtol=1e-5)

    # --- fallback path: M not a multiple of PACK (21 rows -> pad+slice, correct) ---
    x_odd = jax.random.normal(kx3, (3, 7, atomic_unit_size), dtype=jnp.float32)
    y_odd = jax.block_until_ready(leaf_featurize_unit(x_odd, w_f32, b_f32))
    assert jnp.allclose(y_odd, _reference(x_odd, weight, bias), atol=1e-5, rtol=1e-5)

    print("KERNEL_OK")
</pallas_src>

<mosaic_0001>
module attributes {stable_mosaic.version = 11 : i64} {
  func.func @_leaf_featurize_kernel(%arg0: i32, %arg1: memref<4x128xbf16, #tpu.memory_space<vmem>>, %arg2: memref<128x256xbf16, #tpu.memory_space<vmem>>, %arg3: memref<1x256xf32, #tpu.memory_space<vmem>>, %arg4: memref<4x256xbf16, #tpu.memory_space<vmem>>) attributes {dimension_semantics = [#tpu.dimension_semantics<parallel>], iteration_bounds = array<i64: 1>, scalar_prefetch = 0 : i64, scratch_operands = 0 : i64, tpu.core_type = #tpu.core_type<tc>, window_params = [{transform_indices = @transform_0, window_bounds = array<i64: 4, 128>}, {pipeline_mode = #tpu.pipeline_mode<synchronous>, transform_indices = @transform_1, window_bounds = array<i64: 128, 256>}, {pipeline_mode = #tpu.pipeline_mode<synchronous>, transform_indices = @transform_2, window_bounds = array<i64: 1, 256>}, {transform_indices = @transform_3, window_bounds = array<i64: 4, 256>}]} {
    %c0 = arith.constant 0 : index
    %c0_0 = arith.constant 0 : index
    %0 = vector.load %arg1[%c0, %c0_0] : memref<4x128xbf16, #tpu.memory_space<vmem>>, vector<4x128xbf16>
    %c0_1 = arith.constant 0 : index
    %c0_2 = arith.constant 0 : index
    %1 = vector.load %arg2[%c0_1, %c0_2] : memref<128x256xbf16, #tpu.memory_space<vmem>>, vector<128x256xbf16>
    %cst = arith.constant dense<0.000000e+00> : vector<4x256xf32>
    %2 = tpu.matmul %0, %1, %cst {dimension_numbers = #tpu.dot_dimension_numbers<[1], [0], [0], [1], [0, 0, 1, 1], [], []>} : vector<4x128xbf16>, vector<128x256xbf16>, vector<4x256xf32> -> vector<4x256xf32>
    %c0_3 = arith.constant 0 : index
    %c0_4 = arith.constant 0 : index
    %3 = vector.load %arg3[%c0_3, %c0_4] : memref<1x256xf32, #tpu.memory_space<vmem>>, vector<1x256xf32>
    %4 = vector.broadcast %3 : vector<1x256xf32> to vector<4x256xf32>
    %5 = arith.addf %2, %4 : vector<4x256xf32>
    %6 = math.tanh %5 : vector<4x256xf32>
    %7 = arith.truncf %6 : vector<4x256xf32> to vector<4x256xbf16>
    %c0_5 = arith.constant 0 : index
    %c0_6 = arith.constant 0 : index
    %8 = vector.load %arg4[%c0_5, %c0_6] : memref<4x256xbf16, #tpu.memory_space<vmem>>, vector<4x256xbf16>
    tpu.vector_store %arg4[%c0_5, %c0_6], %7 {strides = array<i32>} : memref<4x256xbf16, #tpu.memory_space<vmem>>, vector<4x256xbf16>,
    return
  }
  func.func @transform_0(%arg0: i32) -> (i32, i32) {
    %c0_i32 = arith.constant 0 : i32
    %c0_i32_0 = arith.constant 0 : i32
    return %arg0, %c0_i32 : i32, i32
  }
  func.func @transform_1(%arg0: i32) -> (i32, i32) {
    %c0_i32 = arith.constant 0 : i32
    %c0_i32_0 = arith.constant 0 : i32
    %c0_i32_1 = arith.constant 0 : i32
    return %c0_i32, %c0_i32_0 : i32, i32
  }
  func.func @transform_2(%arg0: i32) -> (i32, i32) {
    %c0_i32 = arith.constant 0 : i32
    %c0_i32_0 = arith.constant 0 : i32
    %c0_i32_1 = arith.constant 0 : i32
    return %c0_i32, %c0_i32_0 : i32, i32
  }
  func.func @transform_3(%arg0: i32) -> (i32, i32) {
    %c0_i32 = arith.constant 0 : i32
    %c0_i32_0 = arith.constant 0 : i32
    return %arg0, %c0_i32 : i32, i32
  }
}

</mosaic_0001>

<llo_original>
// kernel: tpu_custom_call.1
$region0: #{tpu_custom_call.1}
  #allocation0 [shape = 'u32[]', space=smem, size = 0x4, offset = 0x4, fixed_abs, tag = 'smem constant byte address 0x4 - core index']
  #allocation1 [shape = 'u32[144,128]{1,0:T(1,128)}', space=vmem, size = 0x12000, scoped, tag = 'internal scratch']
  %s0 = inlined_call_operand.hbm [shape: bf16[4,128], index: 0, kind: input, shape index: {}]
  %s1 = inlined_call_operand.hbm [shape: bf16[128,256], index: 1, kind: input, shape index: {}]
  %s2 = inlined_call_operand.vmem [shape: f32[1,256], index: 2, kind: input, shape index: {}]
  %s3 = inlined_call_operand.hbm [shape: bf16[4,256], index: 3, kind: output, shape index: {}]
  %s4 = sld [smem:[#allocation0]]
  $region30: #{tpu_custom_call.1} parent=0
    _
  %s6 = ssub.s32 1, %s4
  %s7 = scalar_select 0, %s6, %s4
  $region1: #{tpu_custom_call.1} parent=0
    #allocation2 [shape = 'u8[1024]{0}', space=vmem, size = 0x400, scoped, tag = 'input window, operand 0, single buffered']
    #allocation3 [shape = 's32[1]{0}', space=sflag, size = 0x4, scoped, tag = 'scoped memory for tpu_custom_call.1']
    #allocation4 [shape = 's32[1]{0}', space=sflag, size = 0x4, scoped, tag = 'scoped memory for tpu_custom_call.1']
    #allocation5 [shape = 'u8[65536]{0}', space=vmem, size = 0x10000, scoped, tag = 'input window, operand 1, single buffered']
    #allocation6 [shape = 's32[1]{0}', space=sflag, size = 0x4, scoped, tag = 'scoped memory for tpu_custom_call.1']
    #allocation7 [shape = 'u8[2048]{0}', space=vmem, size = 0x800, scoped, tag = 'output window, operand 0, single buffered']
    %8 = vsyncpa [#allocation3], 0
    %9 = vsyncpa [#allocation6], 0
    %10 = vsyncpa [#allocation4], 0
    // Predicated region
    $region2: #{tpu_custom_call.1} parent=1 // pred_check
      _
    $region3: #{tpu_custom_call.1} parent=1 // pred_check_branch
      %12 = sbr.rel (0) target = $region5
    $region4: #{tpu_custom_call.1} parent=1 // pred_region
      %s14 = ssub.s32 32, 32
      %15 = vsyncadd [#allocation3], %s14
      %s17 = sshll.u32 [#allocation2], 4
      %s18 = int_to_ptr.vmem [resolvable:$true] %s17
      %20 = dma.hbm_to_vmem [thread:$0]  %s0, 32, %s18, [#allocation3]
    $region5: #{tpu_custom_call.1} parent=1 // pred_fallthru
      _
    // Predicated region
    $region6: #{tpu_custom_call.1} parent=1 // pred_check
      _
    $region7: #{tpu_custom_call.1} parent=1 // pred_check_branch
      %22 = sbr.rel (0) target = $region9
    $region8: #{tpu_custom_call.1} parent=1 // pred_region
      %s24 = ssub.s32 2048, 2048
      %25 = vsyncadd [#allocation6], %s24
      %s26 = sshll.u32 [#allocation5], 4
      %s27 = int_to_ptr.vmem [resolvable:$true] %s26
      %32 = dma.hbm_to_vmem [thread:$0]  %s1, 2048, %s27, [#allocation6], 128, 128, 8
    $region9: #{tpu_custom_call.1} parent=1 // pred_fallthru
      _
    // Predicated region
    $region10: #{tpu_custom_call.1} parent=1 // pred_check
      _
    $region11: #{tpu_custom_call.1} parent=1 // pred_check_branch
      %34 = sbr.rel (0) target = $region13
    $region12: #{tpu_custom_call.1} parent=1 // pred_region
      _
    $region13: #{tpu_custom_call.1} parent=1 // pred_fallthru
      _
    // Predicated region
    $region14: #{tpu_custom_call.1} parent=1 // pred_check
      _
    $region15: #{tpu_custom_call.1} parent=1 // pred_check_branch
      %36 = sbr.rel (0) target = $region17
    $region16: #{tpu_custom_call.1} parent=1 // pred_region
      %37 = dma.done [#allocation3], 32
    $region17: #{tpu_custom_call.1} parent=1 // pred_fallthru
      _
    // Predicated region
    $region18: #{tpu_custom_call.1} parent=1 // pred_check
      _
    $region19: #{tpu_custom_call.1} parent=1 // pred_check_branch
      %39 = sbr.rel (0) target = $region21
    $region20: #{tpu_custom_call.1} parent=1 // pred_region
      %40 = dma.done [#allocation6], 2048
    $region21: #{tpu_custom_call.1} parent=1 // pred_fallthru
      _
    %v42 = vld [vmem:[#allocation2] sm:$0x3]
    %v43 = vld [vmem:[#allocation5] sm:$0xff]
    %v44 = vld [vmem:[#allocation5 + $0x8] sm:$0xff]
    %v45 = vld [vmem:[#allocation5 + $0x10] sm:$0xff]
    %v46 = vld [vmem:[#allocation5 + $0x18] sm:$0xff]
    %v47 = vld [vmem:[#allocation5 + $0x20] sm:$0xff]
    %v48 = vld [vmem:[#allocation5 + $0x28] sm:$0xff]
    %v49 = vld [vmem:[#allocation5 + $0x30] sm:$0xff]
    %v50 = vld [vmem:[#allocation5 + $0x38] sm:$0xff]
    %v51 = vld [vmem:[#allocation5 + $0x40] sm:$0xff]
    %v52 = vld [vmem:[#allocation5 + $0x48] sm:$0xff]
    %v53 = vld [vmem:[#allocation5 + $0x50] sm:$0xff]
    %v54 = vld [vmem:[#allocation5 + $0x58] sm:$0xff]
    %v55 = vld [vmem:[#allocation5 + $0x60] sm:$0xff]
    %v56 = vld [vmem:[#allocation5 + $0x68] sm:$0xff]
    %v57 = vld [vmem:[#allocation5 + $0x70] sm:$0xff]
    %v58 = vld [vmem:[#allocation5 + $0x78] sm:$0xff]
    %v59 = vld [vmem:[%s2] sm:$0x3]
    %v61 = vlaneseq
    %v62 = vshrl.u32 %v61, 7
    %v63 = vsub.s32 0, %v62
    %v64 = vrot.slane %v59, %v63
    %v65 = vlaneseq
    %v66 = vshrl.u32 %v65, 7
    %v67 = vsub.s32 1, %v66
    %v68 = vrot.slane %v59, %v67
    %v87 = vunpack.c.l.b16 %v43
    %v88 = vunpack.c.h.b16 %v43
    %v89 = vunpack.c.l.b16 %v44
    %v90 = vunpack.c.h.b16 %v44
    %v91 = vunpack.c.l.b16 %v45
    %v92 = vunpack.c.h.b16 %v45
    %v93 = vunpack.c.l.b16 %v46
    %v94 = vunpack.c.h.b16 %v46
    %v95 = vunpack.c.l.b16 %v47
    %v96 = vunpack.c.h.b16 %v47
    %v97 = vunpack.c.l.b16 %v48
    %v98 = vunpack.c.h.b16 %v48
    %v99 = vunpack.c.l.b16 %v49
    %v100 = vunpack.c.h.b16 %v49
    %v101 = vunpack.c.l.b16 %v50
    %v102 = vunpack.c.h.b16 %v50
    %v103 = vunpack.c.l.b16 %v51
    %v104 = vunpack.c.h.b16 %v51
    %v105 = vunpack.c.l.b16 %v52
    %v106 = vunpack.c.h.b16 %v52
    %v107 = vunpack.c.l.b16 %v53
    %v108 = vunpack.c.h.b16 %v53
    %v109 = vunpack.c.l.b16 %v54
    %v110 = vunpack.c.h.b16 %v54
    %v111 = vunpack.c.l.b16 %v55
    %v112 = vunpack.c.h.b16 %v55
    %v113 = vunpack.c.l.b16 %v56
    %v114 = vunpack.c.h.b16 %v56
    %v115 = vunpack.c.l.b16 %v57
    %v116 = vunpack.c.h.b16 %v57
    %v117 = vunpack.c.l.b16 %v58
    %v118 = vunpack.c.h.b16 %v58
    %v119 = vpack.c.b16 %v89, %v87
    %v120 = vpack.c.b16 %v90, %v88
    %v121 = vpack.c.b16 %v93, %v91
    %v122 = vpack.c.b16 %v94, %v92
    %v123 = vpack.c.b16 %v97, %v95
    %v124 = vpack.c.b16 %v98, %v96
    %v125 = vpack.c.b16 %v101, %v99
    %v126 = vpack.c.b16 %v102, %v100
    %v127 = vpack.c.b16 %v105, %v103
    %v128 = vpack.c.b16 %v106, %v104
    %v129 = vpack.c.b16 %v109, %v107
    %v130 = vpack.c.b16 %v110, %v108
    %v131 = vpack.c.b16 %v113, %v111
    %v132 = vpack.c.b16 %v114, %v112
    %v133 = vpack.c.b16 %v117, %v115
    %v134 = vpack.c.b16 %v118, %v116
    %151 = vmatprep.subr.bf16.mxu0 %v120
    %152 = vmatpush1.bf16.msra.mxu0 %v119
    %153 = vmatprep.subr.bf16.mxu0 %v122
    %154 = vmatpush1.bf16.msra.mxu0 %v121
    %155 = vmatprep.subr.bf16.mxu0 %v124
    %156 = vmatpush1.bf16.msra.mxu0 %v123
    %157 = vmatprep.subr.bf16.mxu0 %v126
    %158 = vmatpush1.bf16.msra.mxu0 %v125
    %159 = vmatprep.subr.bf16.mxu0 %v128
    %160 = vmatpush1.bf16.msra.mxu0 %v127
    %161 = vmatprep.subr.bf16.mxu0 %v130
    %162 = vmatpush1.bf16.msra.mxu0 %v129
    %163 = vmatprep.subr.bf16.mxu0 %v132
    %164 = vmatpush1.bf16.msra.mxu0 %v131
    %165 = vmatprep.subr.bf16.mxu0 %v134
    %166 = vmatpush1.bf16.msra.mxu0 %v133
    %167 = vmatprep.subr.bf16.mxu0 0
    %168 = vmatpush1.bf16.msra.mxu0 0
    %169 = vmatprep.subr.bf16.mxu0 0
    %170 = vmatpush1.bf16.msra.mxu0 0
    %171 = vmatprep.subr.bf16.mxu0 0
    %172 = vmatpush1.bf16.msra.mxu0 0
    %173 = vmatprep.subr.bf16.mxu0 0
    %174 = vmatpush1.bf16.msra.mxu0 0
    %175 = vmatprep.subr.bf16.mxu0 0
    %176 = vmatpush1.bf16.msra.mxu0 0
    %177 = vmatprep.subr.bf16.mxu0 0
    %178 = vmatpush1.bf16.msra.mxu0 0
    %179 = vmatprep.subr.bf16.mxu0 0
    %180 = vmatpush1.bf16.msra.mxu0 0
    %181 = vmatprep.subr.bf16.mxu0 0
    %182 = vmatpush1.bf16.msra.mxu0 0
    %183 = vmatprep.mubr.bf16.mxu0 0
    %184 = vmatmul.mubr.bf16.gmra.mrb[0].mxu0 %v42
    %v185 = vpop.f32.mrb[0].mxu0
    %v186 = vadd.f32 %v64, %v185
    %v187 = vpop.f32.mrb[0].mxu0
    %v188 = vadd.f32 %v68, %v187
    %v189 = vpop.f32.mrb[0].mxu0
    %v190 = vpop.f32.mrb[0].mxu0
    %191 = vdwg.mxu0
    %v192 = vtanh.pop %v186
    %v193 = vtanh.pop %v188
    %v194 = vpack.c.bf16 %v192, %v192
    %v195 = vpack.c.bf16 %v193, %v193
    %v198 = vcombine.low %v194, %v195
    %v200 = vunpack.c.l.s4 1983009808
    %v201 = vunpack.c.0.s8 %v200
    %v202 = vlaneseq
    %v203 = vshrl.u32 %v202, 7
    %v204 = vsub.s32 %v201, %v203
    %v205 = vrot.slane %v198, %v204
    %207 = vst [vmem:[#allocation7] sm:$0xf] %v205
    // Predicated region
    $region22: #{tpu_custom_call.1} parent=1 // pred_check
      _
    $region23: #{tpu_custom_call.1} parent=1 // pred_check_branch
      %209 = sbr.rel (0) target = $region25
    $region24: #{tpu_custom_call.1} parent=1 // pred_region
      %s211 = ssub.s32 64, 64
      %212 = vsyncadd [#allocation4], %s211
      %s214 = sshll.u32 [#allocation7], 4
      %s215 = int_to_ptr.vmem [resolvable:$true] %s214
      %217 = dma.vmem_to_hbm [thread:$0]  %s215, 64, %s3, [#allocation4]
    $region25: #{tpu_custom_call.1} parent=1 // pred_fallthru
      _
    // Predicated region
    $region26: #{tpu_custom_call.1} parent=1 // pred_check
      _
    $region27: #{tpu_custom_call.1} parent=1 // pred_check_branch
      %219 = sbr.rel (0) target = $region29
    $region28: #{tpu_custom_call.1} parent=1 // pred_region
      %220 = dma.done [#allocation4], 64
    $region29: #{tpu_custom_call.1} parent=1 // pred_fallthru
      _
    %221 = vsyncpa [#allocation3], 1
    %222 = vsyncpa [#allocation6], 1
    %223 = vsyncpa [#allocation4], 1

</llo_original>
